<compile_context>
chip_gen: v6e
topology: v6e:2x2x1
jax: 0.10.0
libtpu: 0.0.40
codegen_flags: <defaults>
</compile_context>

<pallas_src>
import functools

import jax
import jax.numpy as jnp
from jax.experimental import pallas as pl
from jax.experimental.pallas import tpu as pltpu

BN_EPS = 1e-5          # nn.BatchNorm1d default eps
LEAKY_SLOPE = 0.2      # nn.LeakyReLU(0.2)

D_IN, D_H1, D_H2 = 32 * 32, 16 * 16, 8 * 8     # 1024, 256, 64
TILE_B_MAX = 1024                               # big tiles: fewer grid steps
MIN_TILE_B = 128                                # don't over-split tiny batches
TARGET_TILES = 4                                # keep both v7x TCs busy+pipelined
VMEM_LIMIT = 32 * 1024 * 1024                   # safe on v5e/v6e and v7x (64 MiB)


def _cdiv(a, b):
    return (a + b - 1) // b


def _round_up(x, m):
    return ((x + m - 1) // m) * m


# ----------------------------- stage 1 ---------------------------------------
# h1 = x @ W1_eff  (bf16 MXU, f32 accumulate).  Per-tile sum / sum-of-squares
# are taken from the f32 accumulator (exact) before the bf16 writeback so the
# wrapper can form full-batch BN1 statistics in one pass (E[h^2] - mu^2).
def _stage1_kernel(x_ref, w1_ref, h1_ref, st_ref):
    h = jnp.dot(x_ref[...].astype(jnp.bfloat16), w1_ref[...],
                preferred_element_type=jnp.float32)            # (tile_b, 256) f32
    st_ref[:, 0:1, :] = jnp.sum(h, axis=0, keepdims=True)[None]
    st_ref[:, 1:2, :] = jnp.sum(h * h, axis=0, keepdims=True)[None]
    h1_ref[...] = h.astype(jnp.bfloat16)                       # bf16 writeback


# ----------------------------- stage 2 ---------------------------------------
# a1 = LeakyReLU(h1 * scale1 + shift1)  (f32 VPU, BN folded by the wrapper)
# h2 = a1 @ W2                          (bf16 MXU, f32 accumulate)
# Padded batch rows are masked to zero for the partial BN2 statistics only on
# tiles that actually contain padding (gated with pl.when).
def _stage2_kernel(h1_ref, sc1_ref, sh1_ref, w2_ref, h2_ref, st_ref,
                   *, batch, tile_b, need_mask):
    a = h1_ref[...].astype(jnp.float32) * sc1_ref[...] + sh1_ref[...]
    a = jnp.where(a >= 0, a, LEAKY_SLOPE * a)
    h2 = jnp.dot(a.astype(jnp.bfloat16), w2_ref[...],
                 preferred_element_type=jnp.float32)           # (tile_b, 64) f32
    h2_ref[...] = h2.astype(jnp.bfloat16)                      # bf16 writeback

    def write_stats(v):
        st_ref[:, 0:1, :] = jnp.sum(v, axis=0, keepdims=True)[None]
        st_ref[:, 1:2, :] = jnp.sum(v * v, axis=0, keepdims=True)[None]

    if need_mask:
        row0 = pl.program_id(0) * tile_b
        has_pad = row0 + tile_b > batch

        @pl.when(jnp.logical_not(has_pad))
        def _():
            write_stats(h2)

        @pl.when(has_pad)
        def _():
            rows = jax.lax.broadcasted_iota(jnp.int32, (tile_b, D_H2), 0) + row0
            write_stats(jnp.where(rows < batch, h2, 0.0))
    else:
        write_stats(h2)


# ----------------------------- stage 3 ---------------------------------------
# a2 = LeakyReLU(h2 * scale2 + shift2); out = a2 . w3 + bias3.
# The 64->1 projection is a VPU multiply + lane reduce (a K=64, N=1 matmul
# would waste the MXU and pay a full push/pop for one output column).
def _stage3_kernel(h2_ref, sc2_ref, sh2_ref, w3_ref, b3_ref, o_ref):
    a = h2_ref[...].astype(jnp.float32) * sc2_ref[...] + sh2_ref[...]
    a = jnp.where(a >= 0, a, LEAKY_SLOPE * a)
    # NOTE: the (tile_b, 1) store is lane-sparse, but the whole output is only
    # 4*B bytes; a lane-dense relayout would cost more XLU work than it saves.
    o_ref[...] = jnp.sum(a * w3_ref[...], axis=-1, keepdims=True) + b3_ref[...]


def discriminator_forward(x, params):
    B, C, H, W = x.shape
    assert C == 1, "flatten to 1024 features requires a single input channel"
    # NOTE: PyTorch BatchNorm1d (training mode) raises for B == 1; here B == 1
    # instead normalizes with var = 0 (i.e. rsqrt(eps)).

    # --- fold F.interpolate(size=(32,32), nearest) + flatten into W1 ---------
    hi = (jnp.arange(32) * H) // 32                 # src = floor(dst * H / 32)
    wi = (jnp.arange(32) * W) // 32
    if H * W <= D_IN:
        # Nearest-neighbor resize is linear:  flatten(resize(x)) @ W1 ==
        # x.reshape(B, H*W) @ W1_eff,  W1_eff[s] = sum of W1 rows mapping to s.
        src = (hi[:, None] * W + wi[None, :]).reshape(-1)            # (1024,)
        w1_eff = jnp.zeros((H * W, D_H1), jnp.float32).at[src].add(params["w1"])
        xf = x.reshape(B, H * W)                    # f32; cast to bf16 in-kernel
        k_dim = H * W
    else:
        # Downsampling case: gather the needed pixels and use W1 as-is.
        # TODO(synk): fuse this gather into stage 1 (scalar-prefetch row indices
        # + pl.Element blocks) to avoid materializing xf in HBM.
        xf = x.astype(jnp.bfloat16)[:, 0][:, hi[:, None], wi[None, :]]
        xf = xf.reshape(B, D_IN)
        w1_eff = params["w1"]
        k_dim = D_IN
    w1_eff = w1_eff.astype(jnp.bfloat16)            # feed the MXU bf16
    w2 = params["w2"].astype(jnp.bfloat16)

    # --- balanced batch tiling ------------------------------------------------
    num_tiles = max(_cdiv(B, TILE_B_MAX), min(TARGET_TILES, _cdiv(B, MIN_TILE_B)))
    tile_b = _round_up(_cdiv(B, num_tiles), 16)     # bf16 sublane packing = 16
    b_pad = num_tiles * tile_b
    if b_pad != B:
        # Zero padding rows: they contribute exactly 0 to the stage-1 sums.
        xf = jnp.pad(xf, ((0, b_pad - B), (0, 0)))
    grid = (num_tiles,)
    cparams = pltpu.CompilerParams(
        dimension_semantics=("parallel",),          # megacore-shard on v7x
        vmem_limit_bytes=VMEM_LIMIT)

    # --- stage 1: big matmul + BN1 partial statistics ------------------------
    h1, st1 = pl.pallas_call(
        _stage1_kernel,
        out_shape=(jax.ShapeDtypeStruct((b_pad, D_H1), jnp.bfloat16),
                   jax.ShapeDtypeStruct((num_tiles, 2, D_H1), jnp.float32)),
        grid=grid,
        in_specs=[pl.BlockSpec((tile_b, k_dim), lambda i: (i, 0)),
                  pl.BlockSpec((k_dim, D_H1), lambda i: (0, 0))],   # resident W1
        out_specs=(pl.BlockSpec((tile_b, D_H1), lambda i: (i, 0)),
                   pl.BlockSpec((1, 2, D_H1), lambda i: (i, 0, 0))),
        compiler_params=cparams,
    )(xf, w1_eff)

    s = jnp.sum(st1, axis=0)                        # (2, 256) -- tiny reduce
    mu1 = s[0] / B                                  # full-batch mean
    var1 = jnp.maximum(s[1] / B - mu1 * mu1, 0.0)   # biased var (training BN)
    # TODO(synk): one-pass E[h^2]-mu^2 can cancel for badly-scaled activations;
    # switch to a mean-shifted two-pass accumulation if tolerance is exceeded.
    inv1 = jax.lax.rsqrt(var1 + BN_EPS)
    scale1 = params["g1"] * inv1                    # (1, 256)
    shift1 = params["b1"] - mu1 * scale1            # (1, 256)

    # --- stage 2: BN1 + LeakyReLU + matmul + BN2 partial statistics ----------
    h2, st2 = pl.pallas_call(
        functools.partial(_stage2_kernel, batch=B, tile_b=tile_b,
                          need_mask=(b_pad != B)),
        out_shape=(jax.ShapeDtypeStruct((b_pad, D_H2), jnp.bfloat16),
                   jax.ShapeDtypeStruct((num_tiles, 2, D_H2), jnp.float32)),
        grid=grid,
        in_specs=[pl.BlockSpec((tile_b, D_H1), lambda i: (i, 0)),
                  pl.BlockSpec((1, D_H1), lambda i: (0, 0)),
                  pl.BlockSpec((1, D_H1), lambda i: (0, 0)),
                  pl.BlockSpec((D_H1, D_H2), lambda i: (0, 0))],    # resident W2
        out_specs=(pl.BlockSpec((tile_b, D_H2), lambda i: (i, 0)),
                   pl.BlockSpec((1, 2, D_H2), lambda i: (i, 0, 0))),
        compiler_params=cparams,
    )(h1, scale1, shift1, w2)

    s = jnp.sum(st2, axis=0)                        # (2, 64)
    mu2 = s[0] / B
    var2 = jnp.maximum(s[1] / B - mu2 * mu2, 0.0)
    inv2 = jax.lax.rsqrt(var2 + BN_EPS)
    scale2 = params["g2"] * inv2                    # (1, 64)
    shift2 = params["b2"] - mu2 * scale2            # (1, 64)

    # --- stage 3: BN2 + LeakyReLU + 64->1 projection --------------------------
    out = pl.pallas_call(
        _stage3_kernel,
        out_shape=jax.ShapeDtypeStruct((b_pad, 1), jnp.float32),
        grid=grid,
        in_specs=[pl.BlockSpec((tile_b, D_H2), lambda i: (i, 0)),
                  pl.BlockSpec((1, D_H2), lambda i: (0, 0)),
                  pl.BlockSpec((1, D_H2), lambda i: (0, 0)),
                  pl.BlockSpec((1, D_H2), lambda i: (0, 0)),
                  pl.BlockSpec((1, 1), lambda i: (0, 0))],
        out_specs=pl.BlockSpec((tile_b, 1), lambda i: (i, 0)),
        compiler_params=cparams,
    )(h2, scale2, shift2, params["w3"], params["bias3"])

    # x[:, :, None, None]
    return out[:B, :, None, None]                   # (B, 1, 1, 1)


def init_params(key):
    """Deterministic parameter init (PyTorch-Linear-style uniform bounds)."""
    k1, k2, k3, k4 = jax.random.split(key, 4)

    def uni(k, shape, fan_in):
        bound = 1.0 / jnp.sqrt(jnp.float32(fan_in))
        return jax.random.uniform(k, shape, jnp.float32, -bound, bound)

    return {
        # Linear weights stored (in_features, out_features): kernels do x @ W.
        "w1": uni(k1, (D_IN, D_H1), D_IN),
        "g1": jnp.ones((1, D_H1), jnp.float32),    # BN1 weight (init = 1)
        "b1": jnp.zeros((1, D_H1), jnp.float32),   # BN1 bias   (init = 0)
        "w2": uni(k2, (D_H1, D_H2), D_H1),
        "g2": jnp.ones((1, D_H2), jnp.float32),
        "b2": jnp.zeros((1, D_H2), jnp.float32),
        "w3": uni(k3, (1, D_H2), D_H2),            # final Linear, row layout
        "bias3": uni(k4, (1, 1), D_H2),            # last Linear has bias=True
    }


if __name__ == "__main__":
    key = jax.random.PRNGKey(0)
    kx, kp = jax.random.split(key)

    # Small input consistent with the module: C must be 1 so C*32*32 == 1024.
    x = jax.random.normal(kx, (2, 1, 16, 16), jnp.float32)
    params = init_params(kp)

    y = jax.jit(discriminator_forward)(x, params)
    jax.block_until_ready(y)
    assert y.shape == (2, 1, 1, 1) and y.dtype == jnp.float32
    print("KERNEL_OK")
</pallas_src>

<mosaic_0001>
module attributes {stable_mosaic.version = 11 : i64} {
  func.func @_stage1_kernel(%arg0: i32, %arg1: memref<16x256xf32, #tpu.memory_space<vmem>>, %arg2: memref<256x256xbf16, #tpu.memory_space<vmem>>, %arg3: memref<16x256xbf16, #tpu.memory_space<vmem>>, %arg4: memref<1x2x256xf32, #tpu.memory_space<vmem>>) attributes {dimension_semantics = [#tpu.dimension_semantics<parallel>], iteration_bounds = array<i64: 1>, scalar_prefetch = 0 : i64, scratch_operands = 0 : i64, tpu.core_type = #tpu.core_type<tc>, window_params = [{transform_indices = @transform_0, window_bounds = array<i64: 16, 256>}, {pipeline_mode = #tpu.pipeline_mode<synchronous>, transform_indices = @transform_1, window_bounds = array<i64: 256, 256>}, {transform_indices = @transform_2, window_bounds = array<i64: 16, 256>}, {transform_indices = @transform_3, window_bounds = array<i64: 1, 2, 256>}]} {
    %c0 = arith.constant 0 : index
    %c0_0 = arith.constant 0 : index
    %0 = vector.load %arg1[%c0, %c0_0] : memref<16x256xf32, #tpu.memory_space<vmem>>, vector<16x256xf32>
    %1 = arith.truncf %0 : vector<16x256xf32> to vector<16x256xbf16>
    %c0_1 = arith.constant 0 : index
    %c0_2 = arith.constant 0 : index
    %2 = vector.load %arg2[%c0_1, %c0_2] : memref<256x256xbf16, #tpu.memory_space<vmem>>, vector<256x256xbf16>
    %cst = arith.constant dense<0.000000e+00> : vector<16x256xf32>
    %3 = tpu.matmul %1, %2, %cst {dimension_numbers = #tpu.dot_dimension_numbers<[1], [0], [0], [1], [0, 0, 1, 1], [], []>} : vector<16x256xbf16>, vector<256x256xbf16>, vector<16x256xf32> -> vector<16x256xf32>
    %cst_3 = arith.constant dense<0.000000e+00> : vector<256xf32>
    %4 = vector.multi_reduction <add>, %3, %cst_3 [0] : vector<16x256xf32> to vector<256xf32>
    %5 = vector.shape_cast %4 : vector<256xf32> to vector<1x256xf32>
    %6 = vector.shape_cast %5 : vector<1x256xf32> to vector<1x1x256xf32>
    %c0_4 = arith.constant 0 : index
    %c0_5 = arith.constant 0 : index
    %c0_6 = arith.constant 0 : index
    %7 = vector.load %arg4[%c0_4, %c0_5, %c0_6] : memref<1x2x256xf32, #tpu.memory_space<vmem>>, vector<1x1x256xf32>
    tpu.vector_store %arg4[%c0_4, %c0_5, %c0_6], %6 {strides = array<i32>} : memref<1x2x256xf32, #tpu.memory_space<vmem>>, vector<1x1x256xf32>,
    %8 = arith.mulf %3, %3 : vector<16x256xf32>
    %cst_7 = arith.constant dense<0.000000e+00> : vector<256xf32>
    %9 = vector.multi_reduction <add>, %8, %cst_7 [0] : vector<16x256xf32> to vector<256xf32>
    %10 = vector.shape_cast %9 : vector<256xf32> to vector<1x256xf32>
    %11 = vector.shape_cast %10 : vector<1x256xf32> to vector<1x1x256xf32>
    %c0_8 = arith.constant 0 : index
    %c1 = arith.constant 1 : index
    %c0_9 = arith.constant 0 : index
    %12 = vector.load %arg4[%c0_8, %c1, %c0_9] : memref<1x2x256xf32, #tpu.memory_space<vmem>>, vector<1x1x256xf32>
    tpu.vector_store %arg4[%c0_8, %c1, %c0_9], %11 {strides = array<i32>} : memref<1x2x256xf32, #tpu.memory_space<vmem>>, vector<1x1x256xf32>,
    %13 = arith.truncf %3 : vector<16x256xf32> to vector<16x256xbf16>
    %c0_10 = arith.constant 0 : index
    %c0_11 = arith.constant 0 : index
    %14 = vector.load %arg3[%c0_10, %c0_11] : memref<16x256xbf16, #tpu.memory_space<vmem>>, vector<16x256xbf16>
    tpu.vector_store %arg3[%c0_10, %c0_11], %13 {strides = array<i32>} : memref<16x256xbf16, #tpu.memory_space<vmem>>, vector<16x256xbf16>,
    return
  }
  func.func @transform_0(%arg0: i32) -> (i32, i32) {
    %c0_i32 = arith.constant 0 : i32
    %c0_i32_0 = arith.constant 0 : i32
    return %arg0, %c0_i32 : i32, i32
  }
  func.func @transform_1(%arg0: i32) -> (i32, i32) {
    %c0_i32 = arith.constant 0 : i32
    %c0_i32_0 = arith.constant 0 : i32
    %c0_i32_1 = arith.constant 0 : i32
    return %c0_i32, %c0_i32_0 : i32, i32
  }
  func.func @transform_2(%arg0: i32) -> (i32, i32) {
    %c0_i32 = arith.constant 0 : i32
    %c0_i32_0 = arith.constant 0 : i32
    return %arg0, %c0_i32 : i32, i32
  }
  func.func @transform_3(%arg0: i32) -> (i32, i32, i32) {
    %c0_i32 = arith.constant 0 : i32
    %c0_i32_0 = arith.constant 0 : i32
    %c0_i32_1 = arith.constant 0 : i32
    return %arg0, %c0_i32, %c0_i32_0 : i32, i32, i32
  }
}

module attributes {stable_mosaic.version = 11 : i64} {
  func.func @_stage2_kernel(%arg0: i32, %arg1: memref<16x256xbf16, #tpu.memory_space<vmem>>, %arg2: memref<1x256xf32, #tpu.memory_space<vmem>>, %arg3: memref<1x256xf32, #tpu.memory_space<vmem>>, %arg4: memref<256x64xbf16, #tpu.memory_space<vmem>>, %arg5: memref<16x64xbf16, #tpu.memory_space<vmem>>, %arg6: memref<1x2x64xf32, #tpu.memory_space<vmem>>) attributes {dimension_semantics = [#tpu.dimension_semantics<parallel>], iteration_bounds = array<i64: 1>, scalar_prefetch = 0 : i64, scratch_operands = 0 : i64, tpu.core_type = #tpu.core_type<tc>, window_params = [{transform_indices = @transform_0, window_bounds = array<i64: 16, 256>}, {pipeline_mode = #tpu.pipeline_mode<synchronous>, transform_indices = @transform_1, window_bounds = array<i64: 1, 256>}, {pipeline_mode = #tpu.pipeline_mode<synchronous>, transform_indices = @transform_2, window_bounds = array<i64: 1, 256>}, {pipeline_mode = #tpu.pipeline_mode<synchronous>, transform_indices = @transform_3, window_bounds = array<i64: 256, 64>}, {transform_indices = @transform_4, window_bounds = array<i64: 16, 64>}, {transform_indices = @transform_5, window_bounds = array<i64: 1, 2, 64>}]} {
    %c0 = arith.constant 0 : index
    %c0_0 = arith.constant 0 : index
    %0 = vector.load %arg1[%c0, %c0_0] : memref<16x256xbf16, #tpu.memory_space<vmem>>, vector<16x256xbf16>
    %1 = arith.extf %0 : vector<16x256xbf16> to vector<16x256xf32>
    %c0_1 = arith.constant 0 : index
    %c0_2 = arith.constant 0 : index
    %2 = vector.load %arg2[%c0_1, %c0_2] : memref<1x256xf32, #tpu.memory_space<vmem>>, vector<1x256xf32>
    %3 = vector.broadcast %2 : vector<1x256xf32> to vector<16x256xf32>
    %4 = arith.mulf %1, %3 : vector<16x256xf32>
    %c0_3 = arith.constant 0 : index
    %c0_4 = arith.constant 0 : index
    %5 = vector.load %arg3[%c0_3, %c0_4] : memref<1x256xf32, #tpu.memory_space<vmem>>, vector<1x256xf32>
    %6 = vector.broadcast %5 : vector<1x256xf32> to vector<16x256xf32>
    %7 = arith.addf %4, %6 : vector<16x256xf32>
    %cst = arith.constant 0.000000e+00 : f32
    %8 = vector.broadcast %cst : f32 to vector<16x256xf32>
    %9 = arith.cmpf oge, %7, %8 : vector<16x256xf32>
    %cst_5 = arith.constant 2.000000e-01 : f32
    %10 = vector.broadcast %cst_5 : f32 to vector<16x256xf32>
    %11 = arith.mulf %10, %7 : vector<16x256xf32>
    %12 = arith.select %9, %7, %11 : vector<16x256xi1>, vector<16x256xf32>
    %13 = arith.truncf %12 : vector<16x256xf32> to vector<16x256xbf16>
    %c0_6 = arith.constant 0 : index
    %c0_7 = arith.constant 0 : index
    %14 = vector.load %arg4[%c0_6, %c0_7] : memref<256x64xbf16, #tpu.memory_space<vmem>>, vector<256x64xbf16>
    %cst_8 = arith.constant dense<0.000000e+00> : vector<16x64xf32>
    %15 = tpu.matmul %13, %14, %cst_8 {dimension_numbers = #tpu.dot_dimension_numbers<[1], [0], [0], [1], [0, 0, 1, 1], [], []>} : vector<16x256xbf16>, vector<256x64xbf16>, vector<16x64xf32> -> vector<16x64xf32>
    %16 = arith.truncf %15 : vector<16x64xf32> to vector<16x64xbf16>
    %c0_9 = arith.constant 0 : index
    %c0_10 = arith.constant 0 : index
    %17 = vector.load %arg5[%c0_9, %c0_10] : memref<16x64xbf16, #tpu.memory_space<vmem>>, vector<16x64xbf16>
    tpu.vector_store %arg5[%c0_9, %c0_10], %16 {strides = array<i32>} : memref<16x64xbf16, #tpu.memory_space<vmem>>, vector<16x64xbf16>,
    %c16_i32 = arith.constant 16 : i32
    %18 = arith.muli %arg0, %c16_i32 : i32
    %c16_i32_11 = arith.constant 16 : i32
    %19 = arith.addi %18, %c16_i32_11 : i32
    %c2_i32 = arith.constant 2 : i32
    %20 = arith.cmpi sgt, %19, %c2_i32 : i32
    %true = arith.constant true
    %21 = arith.xori %20, %true : i1
    %22 = arith.extui %21 : i1 to i32
    %c0_i32 = arith.constant 0 : i32
    %23 = arith.cmpi ne, %22, %c0_i32 : i32
    scf.if %23 {
      %cst_13 = arith.constant dense<0.000000e+00> : vector<64xf32>
      %26 = vector.multi_reduction <add>, %15, %cst_13 [0] : vector<16x64xf32> to vector<64xf32>
      %27 = vector.shape_cast %26 : vector<64xf32> to vector<1x64xf32>
      %28 = vector.shape_cast %27 : vector<1x64xf32> to vector<1x1x64xf32>
      %c0_14 = arith.constant 0 : index
      %c0_15 = arith.constant 0 : index
      %c0_16 = arith.constant 0 : index
      %29 = vector.load %arg6[%c0_14, %c0_15, %c0_16] : memref<1x2x64xf32, #tpu.memory_space<vmem>>, vector<1x1x64xf32>
      tpu.vector_store %arg6[%c0_14, %c0_15, %c0_16], %28 {strides = array<i32>} : memref<1x2x64xf32, #tpu.memory_space<vmem>>, vector<1x1x64xf32>,
      %30 = arith.mulf %15, %15 : vector<16x64xf32>
      %cst_17 = arith.constant dense<0.000000e+00> : vector<64xf32>
      %31 = vector.multi_reduction <add>, %30, %cst_17 [0] : vector<16x64xf32> to vector<64xf32>
      %32 = vector.shape_cast %31 : vector<64xf32> to vector<1x64xf32>
      %33 = vector.shape_cast %32 : vector<1x64xf32> to vector<1x1x64xf32>
      %c0_18 = arith.constant 0 : index
      %c1 = arith.constant 1 : index
      %c0_19 = arith.constant 0 : index
      %34 = vector.load %arg6[%c0_18, %c1, %c0_19] : memref<1x2x64xf32, #tpu.memory_space<vmem>>, vector<1x1x64xf32>
      tpu.vector_store %arg6[%c0_18, %c1, %c0_19], %33 {strides = array<i32>} : memref<1x2x64xf32, #tpu.memory_space<vmem>>, vector<1x1x64xf32>,
    } else {
    }
    %24 = arith.extui %20 : i1 to i32
    %c0_i32_12 = arith.constant 0 : i32
    %25 = arith.cmpi ne, %24, %c0_i32_12 : i32
    scf.if %25 {
      %26 = tpu.iota {dimensions = array<i32: 0>} : vector<16x64xi32>
      %27 = vector.broadcast %18 : i32 to vector<16x64xi32>
      %28 = arith.addi %26, %27 : vector<16x64xi32>
      %c2_i32_13 = arith.constant 2 : i32
      %29 = vector.broadcast %c2_i32_13 : i32 to vector<16x64xi32>
      %30 = arith.cmpi slt, %28, %29 : vector<16x64xi32>
      %cst_14 = arith.constant 0.000000e+00 : f32
      %31 = vector.broadcast %cst_14 : f32 to vector<16x64xf32>
      %32 = arith.select %30, %15, %31 : vector<16x64xi1>, vector<16x64xf32>
      %cst_15 = arith.constant dense<0.000000e+00> : vector<64xf32>
      %33 = vector.multi_reduction <add>, %32, %cst_15 [0] : vector<16x64xf32> to vector<64xf32>
      %34 = vector.shape_cast %33 : vector<64xf32> to vector<1x64xf32>
      %35 = vector.shape_cast %34 : vector<1x64xf32> to vector<1x1x64xf32>
      %c0_16 = arith.constant 0 : index
      %c0_17 = arith.constant 0 : index
      %c0_18 = arith.constant 0 : index
      %36 = vector.load %arg6[%c0_16, %c0_17, %c0_18] : memref<1x2x64xf32, #tpu.memory_space<vmem>>, vector<1x1x64xf32>
      tpu.vector_store %arg6[%c0_16, %c0_17, %c0_18], %35 {strides = array<i32>} : memref<1x2x64xf32, #tpu.memory_space<vmem>>, vector<1x1x64xf32>,
      %37 = arith.mulf %32, %32 : vector<16x64xf32>
      %cst_19 = arith.constant dense<0.000000e+00> : vector<64xf32>
      %38 = vector.multi_reduction <add>, %37, %cst_19 [0] : vector<16x64xf32> to vector<64xf32>
      %39 = vector.shape_cast %38 : vector<64xf32> to vector<1x64xf32>
      %40 = vector.shape_cast %39 : vector<1x64xf32> to vector<1x1x64xf32>
      %c0_20 = arith.constant 0 : index
      %c1 = arith.constant 1 : index
      %c0_21 = arith.constant 0 : index
      %41 = vector.load %arg6[%c0_20, %c1, %c0_21] : memref<1x2x64xf32, #tpu.memory_space<vmem>>, vector<1x1x64xf32>
      tpu.vector_store %arg6[%c0_20, %c1, %c0_21], %40 {strides = array<i32>} : memref<1x2x64xf32, #tpu.memory_space<vmem>>, vector<1x1x64xf32>,
    } else {
    }
    return
  }
  func.func @transform_0(%arg0: i32) -> (i32, i32) {
    %c0_i32 = arith.constant 0 : i32
    %c0_i32_0 = arith.constant 0 : i32
    return %arg0, %c0_i32 : i32, i32
  }
  func.func @transform_1(%arg0: i32) -> (i32, i32) {
    %c0_i32 = arith.constant 0 : i32
    %c0_i32_0 = arith.constant 0 : i32
    %c0_i32_1 = arith.constant 0 : i32
    return %c0_i32, %c0_i32_0 : i32, i32
  }
  func.func @transform_2(%arg0: i32) -> (i32, i32) {
    %c0_i32 = arith.constant 0 : i32
    %c0_i32_0 = arith.constant 0 : i32
    %c0_i32_1 = arith.constant 0 : i32
    return %c0_i32, %c0_i32_0 : i32, i32
  }
  func.func @transform_3(%arg0: i32) -> (i32, i32) {
    %c0_i32 = arith.constant 0 : i32
    %c0_i32_0 = arith.constant 0 : i32
    %c0_i32_1 = arith.constant 0 : i32
    return %c0_i32, %c0_i32_0 : i32, i32
  }
  func.func @transform_4(%arg0: i32) -> (i32, i32) {
    %c0_i32 = arith.constant 0 : i32
    %c0_i32_0 = arith.constant 0 : i32
    return %arg0, %c0_i32 : i32, i32
  }
  func.func @transform_5(%arg0: i32) -> (i32, i32, i32) {
    %c0_i32 = arith.constant 0 : i32
    %c0_i32_0 = arith.constant 0 : i32
    %c0_i32_1 = arith.constant 0 : i32
    return %arg0, %c0_i32, %c0_i32_0 : i32, i32, i32
  }
}

module attributes {stable_mosaic.version = 11 : i64} {
  func.func @_stage3_kernel(%arg0: i32, %arg1: memref<16x64xbf16, #tpu.memory_space<vmem>>, %arg2: memref<1x64xf32, #tpu.memory_space<vmem>>, %arg3: memref<1x64xf32, #tpu.memory_space<vmem>>, %arg4: memref<1x64xf32, #tpu.memory_space<vmem>>, %arg5: memref<1x1xf32, #tpu.memory_space<vmem>>, %arg6: memref<16x1xf32, #tpu.memory_space<vmem>>) attributes {dimension_semantics = [#tpu.dimension_semantics<parallel>], iteration_bounds = array<i64: 1>, scalar_prefetch = 0 : i64, scratch_operands = 0 : i64, tpu.core_type = #tpu.core_type<tc>, window_params = [{transform_indices = @transform_0, window_bounds = array<i64: 16, 64>}, {pipeline_mode = #tpu.pipeline_mode<synchronous>, transform_indices = @transform_1, window_bounds = array<i64: 1, 64>}, {pipeline_mode = #tpu.pipeline_mode<synchronous>, transform_indices = @transform_2, window_bounds = array<i64: 1, 64>}, {pipeline_mode = #tpu.pipeline_mode<synchronous>, transform_indices = @transform_3, window_bounds = array<i64: 1, 64>}, {pipeline_mode = #tpu.pipeline_mode<synchronous>, transform_indices = @transform_4, window_bounds = array<i64: 1, 1>}, {transform_indices = @transform_5, window_bounds = array<i64: 16, 1>}]} {
    %c0 = arith.constant 0 : index
    %c0_0 = arith.constant 0 : index
    %0 = vector.load %arg1[%c0, %c0_0] : memref<16x64xbf16, #tpu.memory_space<vmem>>, vector<16x64xbf16>
    %1 = arith.extf %0 : vector<16x64xbf16> to vector<16x64xf32>
    %c0_1 = arith.constant 0 : index
    %c0_2 = arith.constant 0 : index
    %2 = vector.load %arg2[%c0_1, %c0_2] : memref<1x64xf32, #tpu.memory_space<vmem>>, vector<1x64xf32>
    %3 = vector.broadcast %2 : vector<1x64xf32> to vector<16x64xf32>
    %4 = arith.mulf %1, %3 : vector<16x64xf32>
    %c0_3 = arith.constant 0 : index
    %c0_4 = arith.constant 0 : index
    %5 = vector.load %arg3[%c0_3, %c0_4] : memref<1x64xf32, #tpu.memory_space<vmem>>, vector<1x64xf32>
    %6 = vector.broadcast %5 : vector<1x64xf32> to vector<16x64xf32>
    %7 = arith.addf %4, %6 : vector<16x64xf32>
    %cst = arith.constant 0.000000e+00 : f32
    %8 = vector.broadcast %cst : f32 to vector<16x64xf32>
    %9 = arith.cmpf oge, %7, %8 : vector<16x64xf32>
    %cst_5 = arith.constant 2.000000e-01 : f32
    %10 = vector.broadcast %cst_5 : f32 to vector<16x64xf32>
    %11 = arith.mulf %10, %7 : vector<16x64xf32>
    %12 = arith.select %9, %7, %11 : vector<16x64xi1>, vector<16x64xf32>
    %c0_6 = arith.constant 0 : index
    %c0_7 = arith.constant 0 : index
    %13 = vector.load %arg4[%c0_6, %c0_7] : memref<1x64xf32, #tpu.memory_space<vmem>>, vector<1x64xf32>
    %14 = vector.broadcast %13 : vector<1x64xf32> to vector<16x64xf32>
    %15 = arith.mulf %12, %14 : vector<16x64xf32>
    %cst_8 = arith.constant dense<0.000000e+00> : vector<16xf32>
    %16 = vector.multi_reduction <add>, %15, %cst_8 [1] : vector<16x64xf32> to vector<16xf32>
    %17 = vector.shape_cast %16 : vector<16xf32> to vector<16x1xf32>
    %c0_9 = arith.constant 0 : index
    %c0_10 = arith.constant 0 : index
    %18 = vector.load %arg5[%c0_9, %c0_10] : memref<1x1xf32, #tpu.memory_space<vmem>>, vector<1x1xf32>
    %19 = vector.broadcast %18 : vector<1x1xf32> to vector<16x1xf32>
    %20 = arith.addf %17, %19 : vector<16x1xf32>
    %c0_11 = arith.constant 0 : index
    %c0_12 = arith.constant 0 : index
    %21 = vector.load %arg6[%c0_11, %c0_12] : memref<16x1xf32, #tpu.memory_space<vmem>>, vector<16x1xf32>
    tpu.vector_store %arg6[%c0_11, %c0_12], %20 {strides = array<i32>} : memref<16x1xf32, #tpu.memory_space<vmem>>, vector<16x1xf32>,
    return
  }
  func.func @transform_0(%arg0: i32) -> (i32, i32) {
    %c0_i32 = arith.constant 0 : i32
    %c0_i32_0 = arith.constant 0 : i32
    return %arg0, %c0_i32 : i32, i32
  }
  func.func @transform_1(%arg0: i32) -> (i32, i32) {
    %c0_i32 = arith.constant 0 : i32
    %c0_i32_0 = arith.constant 0 : i32
    %c0_i32_1 = arith.constant 0 : i32
    return %c0_i32, %c0_i32_0 : i32, i32
  }
  func.func @transform_2(%arg0: i32) -> (i32, i32) {
    %c0_i32 = arith.constant 0 : i32
    %c0_i32_0 = arith.constant 0 : i32
    %c0_i32_1 = arith.constant 0 : i32
    return %c0_i32, %c0_i32_0 : i32, i32
  }
  func.func @transform_3(%arg0: i32) -> (i32, i32) {
    %c0_i32 = arith.constant 0 : i32
    %c0_i32_0 = arith.constant 0 : i32
    %c0_i32_1 = arith.constant 0 : i32
    return %c0_i32, %c0_i32_0 : i32, i32
  }
  func.func @transform_4(%arg0: i32) -> (i32, i32) {
    %c0_i32 = arith.constant 0 : i32
    %c0_i32_0 = arith.constant 0 : i32
    %c0_i32_1 = arith.constant 0 : i32
    return %c0_i32, %c0_i32_0 : i32, i32
  }
  func.func @transform_5(%arg0: i32) -> (i32, i32) {
    %c0_i32 = arith.constant 0 : i32
    %c0_i32_0 = arith.constant 0 : i32
    return %arg0, %c0_i32 : i32, i32
  }
}

</mosaic_0001>

<llo_original>
// kernel: discriminator_forward.5
$region0: #{discriminator_forward.5}
  #allocation0 [shape = 'u32[]', space=smem, size = 0x4, offset = 0x4, fixed_abs, tag = 'smem constant byte address 0x4 - core index']
  #allocation1 [shape = 'u32[144,128]{1,0:T(1,128)}', space=vmem, size = 0x12000, scoped, tag = 'internal scratch']
  #allocation2 [shape = 'f32[1,1]{1,0:T(1,128)S(1)}', space=vmem, size = 0x200, scoped, tag = 'scoped memory for discriminator_forward.5']
  %s0 = inlined_call_operand.vmem [shape: bf16[16,64], index: 0, kind: input, shape index: {}]
  %s1 = inlined_call_operand.vmem [shape: f32[1,64], index: 1, kind: input, shape index: {}]
  %s2 = inlined_call_operand.vmem [shape: f32[1,64], index: 2, kind: input, shape index: {}]
  %s3 = inlined_call_operand.vmem [shape: f32[1,64], index: 3, kind: input, shape index: {}]
  %s4 = inlined_call_operand.<no memory space> [shape: f32[1,1], index: 4, kind: input, shape index: {}]
  %s5 = inlined_call_operand.vmem [shape: f32[16,1], index: 5, kind: output, shape index: {}]
  %s6 = sld [smem:[#allocation0]]
  $region30: #{discriminator_forward.5} parent=0
    _
  %s8 = ssub.s32 1, %s6
  %s9 = scalar_select 0, %s8, %s6
  %v10 = vstv %s4
  %11 = vst [vmem:[#allocation2] sm:$0x1] %v10
  // Predicated region
  $region2: #{discriminator_forward.5} parent=0 // pred_check
    _
  $region3: #{discriminator_forward.5} parent=0 // pred_check_branch
    %13 = sbr.rel (0) target = $region5
  $region4: #{discriminator_forward.5} parent=0 // pred_region
    _
  $region5: #{discriminator_forward.5} parent=0 // pred_fallthru
    _
  // Predicated region
  $region6: #{discriminator_forward.5} parent=0 // pred_check
    _
  $region7: #{discriminator_forward.5} parent=0 // pred_check_branch
    %15 = sbr.rel (0) target = $region9
  $region8: #{discriminator_forward.5} parent=0 // pred_region
    _
  $region9: #{discriminator_forward.5} parent=0 // pred_fallthru
    _
  // Predicated region
  $region10: #{discriminator_forward.5} parent=0 // pred_check
    _
  $region11: #{discriminator_forward.5} parent=0 // pred_check_branch
    %17 = sbr.rel (0) target = $region13
  $region12: #{discriminator_forward.5} parent=0 // pred_region
    _
  $region13: #{discriminator_forward.5} parent=0 // pred_fallthru
    _
  // Predicated region
  $region14: #{discriminator_forward.5} parent=0 // pred_check
    _
  $region15: #{discriminator_forward.5} parent=0 // pred_check_branch
    %19 = sbr.rel (0) target = $region17
  $region16: #{discriminator_forward.5} parent=0 // pred_region
    _
  $region17: #{discriminator_forward.5} parent=0 // pred_fallthru
    _
  // Predicated region
  $region18: #{discriminator_forward.5} parent=0 // pred_check
    _
  $region19: #{discriminator_forward.5} parent=0 // pred_check_branch
    %21 = sbr.rel (0) target = $region21
  $region20: #{discriminator_forward.5} parent=0 // pred_region
    _
  $region21: #{discriminator_forward.5} parent=0 // pred_fallthru
    _
  %v22 = vld [vmem:[%s0] sm:$0xf]
  %v23 = vld [vmem:[%s0 + $0x4] sm:$0xf]
  %v24 = vunpack.c.l.bf16 %v22
  %v25 = vunpack.c.l.bf16 %v23
  %v26 = vld [vmem:[%s1] sm:$0x1]
  %v28 = vlaneseq
  %v29 = vshrl.u32 %v28, 7
  %v30 = vsub.s32 0, %v29
  %v31 = vrot.slane %v26, %v30
  %v33 = vmul.f32 %v24, %v31
  %v34 = vmul.f32 %v25, %v31
  %v35 = vld [vmem:[%s2] sm:$0x1]
  %v37 = vlaneseq
  %v38 = vshrl.u32 %v37, 7
  %v39 = vsub.s32 0, %v38
  %v40 = vrot.slane %v35, %v39
  %v42 = vadd.f32 %v33, %v40
  %v43 = vadd.f32 %v34, %v40
  %vm44 = vcmp.ge.f32.partialorder %v42, 0.0
  %vm45 = vcmp.ge.f32.partialorder %v43, 0.0
  %v46 = vmul.f32 %v42, 0.2
  %v47 = vmul.f32 %v43, 0.2
  %v48 = vsel %vm44, %v42, %v46
  %v49 = vsel %vm45, %v43, %v47
  %v50 = vld [vmem:[%s3] sm:$0x1]
  %v52 = vlaneseq
  %v53 = vshrl.u32 %v52, 7
  %v54 = vsub.s32 0, %v53
  %v55 = vrot.slane %v50, %v54
  %v57 = vmul.f32 %v48, %v55
  %v58 = vmul.f32 %v49, %v55
  %vm59 = vcmask 523264
  %v60 = vsel %vm59, %v57, 0.0
  %61 = vadd.xlane.f32.xlu0 %v60
  %v62 = vpop.xlane.xlu0 %61
  %v63 = vsel %vm59, %v58, 0.0
  %64 = vadd.xlane.f32.xlu0 %v63
  %v65 = vpop.xlane.xlu0 %64
  %v66 = vld [vmem:[#allocation2] sm:$0x1]
  %v68 = vlaneseq
  %v69 = vshrl.u32 %v68, 7
  %v70 = vsub.s32 0, %v69
  %v71 = vrot.slane %v66, %v70
  %v73 = vadd.f32 %v62, %v71
  %v74 = vadd.f32 %v65, %v71
  %vm75 = vcmask 7168
  %76 = vst.msk [vmem:[%s5] sm:$0xff] %vm75, %v73
  %77 = vst.msk [vmem:[%s5 + $0x8] sm:$0xff] %vm75, %v74
  // Predicated region
  $region22: #{discriminator_forward.5} parent=0 // pred_check
    _
  $region23: #{discriminator_forward.5} parent=0 // pred_check_branch
    %79 = sbr.rel (0) target = $region25
  $region24: #{discriminator_forward.5} parent=0 // pred_region
    _
  $region25: #{discriminator_forward.5} parent=0 // pred_fallthru
    _
  // Predicated region
  $region26: #{discriminator_forward.5} parent=0 // pred_check
    _
  $region27: #{discriminator_forward.5} parent=0 // pred_check_branch
    %81 = sbr.rel (0) target = $region29
  $region28: #{discriminator_forward.5} parent=0 // pred_region
    _
  $region29: #{discriminator_forward.5} parent=0 // pred_fallthru
    _

// kernel: discriminator_forward.4
$region0: #{discriminator_forward.4}
  #allocation0 [shape = 'u32[]', space=smem, size = 0x4, offset = 0x4, fixed_abs, tag = 'smem constant byte address 0x4 - core index']
  #allocation1 [shape = 'u32[144,128]{1,0:T(1,128)}', space=vmem, size = 0x12000, scoped, tag = 'internal scratch']
  %s0 = inlined_call_operand.vmem [shape: bf16[16,256], index: 0, kind: input, shape index: {}]
  %s1 = inlined_call_operand.vmem [shape: f32[1,256], index: 1, kind: input, shape index: {}]
  %s2 = inlined_call_operand.vmem [shape: f32[1,256], index: 2, kind: input, shape index: {}]
  %s3 = inlined_call_operand.vmem [shape: bf16[256,64], index: 3, kind: input, shape index: {}]
  %s4 = inlined_call_operand.vmem [shape: bf16[16,64], index: 4, kind: output, shape index: {0}]
  %s5 = inlined_call_operand.vmem [shape: f32[1,2,64], index: 5, kind: output, shape index: {1}]
  %6 = xla_tuple %s4, %s5
  %s7 = sld [smem:[#allocation0]]
  $region42: #{discriminator_forward.4} parent=0
    _
  %s9 = ssub.s32 1, %s7
  %s10 = scalar_select 0, %s9, %s7
  // Predicated region
  $region2: #{discriminator_forward.4} parent=0 // pred_check
    _
  $region3: #{discriminator_forward.4} parent=0 // pred_check_branch
    %12 = sbr.rel (0) target = $region5
  $region4: #{discriminator_forward.4} parent=0 // pred_region
    _
  $region5: #{discriminator_forward.4} parent=0 // pred_fallthru
    _
  // Predicated region
  $region6: #{discriminator_forward.4} parent=0 // pred_check
    _
  $region7: #{discriminator_forward.4} parent=0 // pred_check_branch
    %14 = sbr.rel (0) target = $region9
  $region8: #{discriminator_forward.4} parent=0 // pred_region
    _
  $region9: #{discriminator_forward.4} parent=0 // pred_fallthru
    _
  // Predicated region
  $region10: #{discriminator_forward.4} parent=0 // pred_check
    _
  $region11: #{discriminator_forward.4} parent=0 // pred_check_branch
    %16 = sbr.rel (0) target = $region13
  $region12: #{discriminator_forward.4} parent=0 // pred_region
    _
  $region13: #{discriminator_forward.4} parent=0 // pred_fallthru
    _
  // Predicated region
  $region14: #{discriminator_forward.4} parent=0 // pred_check
    _
  $region15: #{discriminator_forward.4} parent=0 // pred_check_branch
    %18 = sbr.rel (0) target = $region17
  $region16: #{discriminator_forward.4} parent=0 // pred_region
    _
  $region17: #{discriminator_forward.4} parent=0 // pred_fallthru
    _
  %v20 = vld [vmem:[%s0] sm:$0xff]
  %v21 = vld [vmem:[%s0 + $0x8] sm:$0xff]
  %v22 = vunpack.c.l.bf16 %v20
  %v23 = vunpack.c.h.bf16 %v20
  %v24 = vunpack.c.l.bf16 %v21
  %v25 = vunpack.c.h.bf16 %v21
  %v26 = vld [vmem:[%s1] sm:$0x3]
  %v28 = vlaneseq
  %v29 = vshrl.u32 %v28, 7
  %v30 = vsub.s32 0, %v29
  %v31 = vrot.slane %v26, %v30
  %v32 = vlaneseq
  %v33 = vshrl.u32 %v32, 7
  %v34 = vsub.s32 1, %v33
  %v35 = vrot.slane %v26, %v34
  %v38 = vmul.f32 %v22, %v31
  %v39 = vmul.f32 %v23, %v35
  %v40 = vmul.f32 %v24, %v31
  %v41 = vmul.f32 %v25, %v35
  %v42 = vld [vmem:[%s2] sm:$0x3]
  %v44 = vlaneseq
  %v45 = vshrl.u32 %v44, 7
  %v46 = vsub.s32 0, %v45
  %v47 = vrot.slane %v42, %v46
  %v48 = vlaneseq
  %v49 = vshrl.u32 %v48, 7
  %v50 = vsub.s32 1, %v49
  %v51 = vrot.slane %v42, %v50
  %v54 = vadd.f32 %v38, %v47
  %v55 = vadd.f32 %v39, %v51
  %v56 = vadd.f32 %v40, %v47
  %v57 = vadd.f32 %v41, %v51
  %vm58 = vcmp.ge.f32.partialorder %v54, 0.0
  %vm59 = vcmp.ge.f32.partialorder %v55, 0.0
  %vm60 = vcmp.ge.f32.partialorder %v56, 0.0
  %vm61 = vcmp.ge.f32.partialorder %v57, 0.0
  %v62 = vmul.f32 %v54, 0.2
  %v63 = vmul.f32 %v55, 0.2
  %v64 = vmul.f32 %v56, 0.2
  %v65 = vmul.f32 %v57, 0.2
  %v66 = vsel %vm58, %v54, %v62
  %v67 = vsel %vm59, %v55, %v63
  %v68 = vsel %vm60, %v56, %v64
  %v69 = vsel %vm61, %v57, %v65
  %v70 = vpack.c.bf16 %v68, %v66
  %v71 = vpack.c.bf16 %v69, %v67
  %v72 = vld [vmem:[%s3] sm:$0xf]
  %v73 = vld [vmem:[%s3 + $0x4] sm:$0xf]
  %v74 = vld [vmem:[%s3 + $0x8] sm:$0xf]
  %v75 = vld [vmem:[%s3 + $0xc] sm:$0xf]
  %v76 = vld [vmem:[%s3 + $0x10] sm:$0xf]
  %v77 = vld [vmem:[%s3 + $0x14] sm:$0xf]
  %v78 = vld [vmem:[%s3 + $0x18] sm:$0xf]
  %v79 = vld [vmem:[%s3 + $0x1c] sm:$0xf]
  %v80 = vld [vmem:[%s3 + $0x20] sm:$0xf]
  %v81 = vld [vmem:[%s3 + $0x24] sm:$0xf]
  %v82 = vld [vmem:[%s3 + $0x28] sm:$0xf]
  %v83 = vld [vmem:[%s3 + $0x2c] sm:$0xf]
  %v84 = vld [vmem:[%s3 + $0x30] sm:$0xf]
  %v85 = vld [vmem:[%s3 + $0x34] sm:$0xf]
  %v86 = vld [vmem:[%s3 + $0x38] sm:$0xf]
  %v87 = vld [vmem:[%s3 + $0x3c] sm:$0xf]
  %v88 = vld [vmem:[%s3 + $0x40] sm:$0xf]
  %v89 = vld [vmem:[%s3 + $0x44] sm:$0xf]
  %v90 = vld [vmem:[%s3 + $0x48] sm:$0xf]
  %v91 = vld [vmem:[%s3 + $0x4c] sm:$0xf]
  %v92 = vld [vmem:[%s3 + $0x50] sm:$0xf]
  %v93 = vld [vmem:[%s3 + $0x54] sm:$0xf]
  %v94 = vld [vmem:[%s3 + $0x58] sm:$0xf]
  %v95 = vld [vmem:[%s3 + $0x5c] sm:$0xf]
  %v96 = vld [vmem:[%s3 + $0x60] sm:$0xf]
  %v97 = vld [vmem:[%s3 + $0x64] sm:$0xf]
  %v98 = vld [vmem:[%s3 + $0x68] sm:$0xf]
  %v99 = vld [vmem:[%s3 + $0x6c] sm:$0xf]
  %v100 = vld [vmem:[%s3 + $0x70] sm:$0xf]
  %v101 = vld [vmem:[%s3 + $0x74] sm:$0xf]
  %v102 = vld [vmem:[%s3 + $0x78] sm:$0xf]
  %v103 = vld [vmem:[%s3 + $0x7c] sm:$0xf]
  %v136 = vunpack.c.l.b16 %v72
  %v137 = vunpack.c.l.b16 %v73
  %v138 = vunpack.c.l.b16 %v74
  %v139 = vunpack.c.l.b16 %v75
  %v140 = vunpack.c.l.b16 %v76
  %v141 = vunpack.c.l.b16 %v77
  %v142 = vunpack.c.l.b16 %v78
  %v143 = vunpack.c.l.b16 %v79
  %v144 = vunpack.c.l.b16 %v80
  %v145 = vunpack.c.l.b16 %v81
  %v146 = vunpack.c.l.b16 %v82
  %v147 = vunpack.c.l.b16 %v83
  %v148 = vunpack.c.l.b16 %v84
  %v149 = vunpack.c.l.b16 %v85
  %v150 = vunpack.c.l.b16 %v86
  %v151 = vunpack.c.l.b16 %v87
  %v152 = vunpack.c.l.b16 %v88
  %v153 = vunpack.c.l.b16 %v89
  %v154 = vunpack.c.l.b16 %v90
  %v155 = vunpack.c.l.b16 %v91
  %v156 = vunpack.c.l.b16 %v92
  %v157 = vunpack.c.l.b16 %v93
  %v158 = vunpack.c.l.b16 %v94
  %v159 = vunpack.c.l.b16 %v95
  %v160 = vunpack.c.l.b16 %v96
  %v161 = vunpack.c.l.b16 %v97
  %v162 = vunpack.c.l.b16 %v98
  %v163 = vunpack.c.l.b16 %v99
  %v164 = vunpack.c.l.b16 %v100
  %v165 = vunpack.c.l.b16 %v101
  %v166 = vunpack.c.l.b16 %v102
  %v167 = vunpack.c.l.b16 %v103
  %v168 = vpack.c.b16 %v137, %v136
  %v169 = vpack.c.b16 %v139, %v138
  %v170 = vpack.c.b16 %v141, %v140
  %v171 = vpack.c.b16 %v143, %v142
  %v172 = vpack.c.b16 %v145, %v144
  %v173 = vpack.c.b16 %v147, %v146
  %v174 = vpack.c.b16 %v149, %v148
  %v175 = vpack.c.b16 %v151, %v150
  %v176 = vpack.c.b16 %v153, %v152
  %v177 = vpack.c.b16 %v155, %v154
  %v178 = vpack.c.b16 %v157, %v156
  %v179 = vpack.c.b16 %v159, %v158
  %v180 = vpack.c.b16 %v161, %v160
  %v181 = vpack.c.b16 %v163, %v162
  %v182 = vpack.c.b16 %v165, %v164
  %v183 = vpack.c.b16 %v167, %v166
  %200 = vmatprep.subr.bf16.mxu0 0
  %201 = vmatpush1.bf16.msra.mxu0 %v175
  %202 = vmatprep.subr.bf16.mxu0 0
  %203 = vmatpush1.bf16.msra.mxu0 %v174
  %204 = vmatprep.subr.bf16.mxu0 0
  %205 = vmatpush1.bf16.msra.mxu0 %v173
  %206 = vmatprep.subr.bf16.mxu0 0
  %207 = vmatpush1.bf16.msra.mxu0 %v172
  %208 = vmatprep.subr.bf16.mxu0 0
  %209 = vmatpush1.bf16.msra.mxu0 %v171
  %210 = vmatprep.subr.bf16.mxu0 0
  %211 = vmatpush1.bf16.msra.mxu0 %v170
  %212 = vmatprep.subr.bf16.mxu0 0
  %213 = vmatpush1.bf16.msra.mxu0 %v169
  %214 = vmatprep.subr.bf16.mxu0 0
  %215 = vmatpush1.bf16.msra.mxu0 %v168
  %216 = vmatprep.subr.bf16.mxu0 0
  %217 = vmatpush2.bf16.msra.mxu0 %v183
  %218 = vmatprep.subr.bf16.mxu0 0
  %219 = vmatpush2.bf16.msra.mxu0 %v182
  %220 = vmatprep.subr.bf16.mxu0 0
  %221 = vmatpush2.bf16.msra.mxu0 %v181
  %222 = vmatprep.subr.bf16.mxu0 0
  %223 = vmatpush2.bf16.msra.mxu0 %v180
  %224 = vmatprep.subr.bf16.mxu0 0
  %225 = vmatpush2.bf16.msra.mxu0 %v179
  %226 = vmatprep.subr.bf16.mxu0 0
  %227 = vmatpush2.bf16.msra.mxu0 %v178
  %228 = vmatprep.subr.bf16.mxu0 0
  %229 = vmatpush2.bf16.msra.mxu0 %v177
  %230 = vmatprep.subr.bf16.mxu0 0
  %231 = vmatpush2.bf16.msra.mxu0 %v176
  %232 = vmatprep.mubr.bf16.mxu0 %v71
  %233 = vmatmul.mubr.bf16.gmra.mxu0 %v70
  %v234 = vpop.f32.mrf.mxu0
  %v235 = vadd.f32 0.0, %v234
  %v236 = vpop.f32.mrf.mxu0
  %v237 = vpop.f32.mrf.mxu0
  %v238 = vadd.f32 0.0, %v237
  %v239 = vpop.f32.mrf.mxu0
  %240 = vdwg.mxu0
  %v241 = vpack.c.bf16 %v238, %v235
  %v243 = vunpack.c.l.b16 %v241
  %v244 = vunpack.c.h.b16 %v241
  %v245 = vpack.c.b16 %v243, %v243
  %v246 = vpack.c.b16 %v244, %v244
  %vm249 = vcmask 519168
  %250 = vst.msk [vmem:[%s4] sm:$0xf] %vm249, %v245
  %251 = vst.msk [vmem:[%s4 + $0x4] sm:$0xf] %vm249, %v246
  %s252 = smul.u32 0, 16
  %s253 = sadd.s32 %s252, 16
  %p254 = scmp.gt.s32.totalorder %s253, 2
  %p255 = scmp.le.s32.totalorder %s253, 2
  // Predicated region
  $region18: #{discriminator_forward.4} parent=0 // pred_check
    %p256 = pneg %p255
  $region19: #{discriminator_forward.4} parent=0 // pred_check_branch
    %258 = sbr.rel (%p256) target = $region21
  $region20: #{discriminator_forward.4} parent=0 // pred_region
    %vm259 = vcmask 523264
    %v260 = vsel %vm259, %v235, 0.0
    %v261 = vsel %vm259, %v238, 0.0
    %v262 = vadd.f32 %v260, %v261
    %v263 = vrot.slane %v262, 4
    %v264 = vadd.f32 %v262, %v263
    %v265 = vrot.slane %v264, 2
    %v266 = vadd.f32 %v264, %v265
    %v267 = vrot.slane %v266, 1
    %v268 = vadd.f32 %v266, %v267
    %vm269 = vcmask 516096
    %270 = vst.msk [vmem:[%s5] sm:$0x1] %vm269, %v268
    %v271 = vmul.f32 %v235, %v235
    %v272 = vmul.f32 %v238, %v238
    %v273 = vsel %vm259, %v271, 0.0
    %v274 = vsel %vm259, %v272, 0.0
    %v275 = vadd.f32 %v273, %v274
    %v276 = vrot.slane %v275, 4
    %v277 = vadd.f32 %v275, %v276
    %v278 = vrot.slane %v277, 2
    %v279 = vadd.f32 %v277, %v278
    %v280 = vrot.slane %v279, 1
    %v281 = vadd.f32 %v279, %v280
    %282 = vst.msk [vmem:[%s5 + $0x1] sm:$0x1] %vm269, %v281
  $region21: #{discriminator_forward.4} parent=0 // pred_fallthru
    _
  // Predicated region
  $region22: #{discriminator_forward.4} parent=0 // pred_check
    %p283 = pneg %p254
  $region23: #{discriminator_forward.4} parent=0 // pred_check_branch
    %285 = sbr.rel (%p283) target = $region25
  $region24: #{discriminator_forward.4} parent=0 // pred_region
    %v286 = vlaneseq
    %v287 = vshrl.u32 %v286, 7
    %v288 = vadd.s32 %v287, 8
    %v289 = vstv %s252
    %v290 = vadd.s32 %v287, %v289
    %v291 = vadd.s32 %v288, %v289
    %vm292 = vcmp.lt.s32.totalorder %v290, 2
    %vm293 = vcmp.lt.s32.totalorder %v291, 2
    %v294 = vsel %vm292, %v235, 0.0
    %v295 = vsel %vm293, %v238, 0.0
    %vm296 = vcmask 523264
    %v297 = vsel %vm296, %v294, 0.0
    %v298 = vsel %vm296, %v295, 0.0
    %v299 = vadd.f32 %v297, %v298
    %v300 = vrot.slane %v299, 4
    %v301 = vadd.f32 %v299, %v300
    %v302 = vrot.slane %v301, 2
    %v303 = vadd.f32 %v301, %v302
    %v304 = vrot.slane %v303, 1
    %v305 = vadd.f32 %v303, %v304
    %vm306 = vcmask 516096
    %307 = vst.msk [vmem:[%s5] sm:$0x1] %vm306, %v305
    %v308 = vmul.f32 %v294, %v294
    %v309 = vmul.f32 %v295, %v295
    %v310 = vsel %vm296, %v308, 0.0
    %v311 = vsel %vm296, %v309, 0.0
    %v312 = vadd.f32 %v310, %v311
    %v313 = vrot.slane %v312, 4
    %v314 = vadd.f32 %v312, %v313
    %v315 = vrot.slane %v314, 2
    %v316 = vadd.f32 %v314, %v315
    %v317 = vrot.slane %v316, 1
    %v318 = vadd.f32 %v316, %v317
    %319 = vst.msk [vmem:[%s5 + $0x1] sm:$0x1] %vm306, %v318
  $region25: #{discriminator_forward.4} parent=0 // pred_fallthru
    _
  // Predicated region
  $region26: #{discriminator_forward.4} parent=0 // pred_check
    _
  $region27: #{discriminator_forward.4} parent=0 // pred_check_branch
    %321 = sbr.rel (0) target = $region29
  $region28: #{discriminator_forward.4} parent=0 // pred_region
    _
  $region29: #{discriminator_forward.4} parent=0 // pred_fallthru
    _
  // Predicated region
  $region30: #{discriminator_forward.4} parent=0 // pred_check
    _
  $region31: #{discriminator_forward.4} parent=0 // pred_check_branch
    %323 = sbr.rel (0) target = $region33
  $region32: #{discriminator_forward.4} parent=0 // pred_region
    _
  $region33: #{discriminator_forward.4} parent=0 // pred_fallthru
    _
  // Predicated region
  $region34: #{discriminator_forward.4} parent=0 // pred_check
    _
  $region35: #{discriminator_forward.4} parent=0 // pred_check_branch
    %325 = sbr.rel (0) target = $region37
  $region36: #{discriminator_forward.4} parent=0 // pred_region
    _
  $region37: #{discriminator_forward.4} parent=0 // pred_fallthru
    _
  // Predicated region
  $region38: #{discriminator_forward.4} parent=0 // pred_check
    _
  $region39: #{discriminator_forward.4} parent=0 // pred_check_branch
    %327 = sbr.rel (0) target = $region41
  $region40: #{discriminator_forward.4} parent=0 // pred_region
    _
  $region41: #{discriminator_forward.4} parent=0 // pred_fallthru
    _

// kernel: discriminator_forward.3
$region0: #{discriminator_forward.3}
  #allocation0 [shape = 'u32[]', space=smem, size = 0x4, offset = 0x4, fixed_abs, tag = 'smem constant byte address 0x4 - core index']
  #allocation1 [shape = 'u32[144,128]{1,0:T(1,128)}', space=vmem, size = 0x12000, scoped, tag = 'internal scratch']
  %s0 = inlined_call_operand.vmem [shape: f32[16,256], index: 0, kind: input, shape index: {}]
  %s1 = inlined_call_operand.vmem [shape: bf16[256,256], index: 1, kind: input, shape index: {}]
  %s2 = inlined_call_operand.vmem [shape: bf16[16,256], index: 2, kind: output, shape index: {0}]
  %s3 = inlined_call_operand.vmem [shape: f32[1,2,256], index: 3, kind: output, shape index: {1}]
  %4 = xla_tuple %s2, %s3
  %s5 = sld [smem:[#allocation0]]
  $region26: #{discriminator_forward.3} parent=0
    _
  %s7 = ssub.s32 1, %s5
  %s8 = scalar_select 0, %s7, %s5
  // Predicated region
  $region2: #{discriminator_forward.3} parent=0 // pred_check
    _
  $region3: #{discriminator_forward.3} parent=0 // pred_check_branch
    %10 = sbr.rel (0) target = $region5
  $region4: #{discriminator_forward.3} parent=0 // pred_region
    _
  $region5: #{discriminator_forward.3} parent=0 // pred_fallthru
    _
  // Predicated region
  $region6: #{discriminator_forward.3} parent=0 // pred_check
    _
  $region7: #{discriminator_forward.3} parent=0 // pred_check_branch
    %12 = sbr.rel (0) target = $region9
  $region8: #{discriminator_forward.3} parent=0 // pred_region
    _
  $region9: #{discriminator_forward.3} parent=0 // pred_fallthru
    _
  %v13 = vld [vmem:[%s0] sm:$0xff]
  %v14 = vld [vmem:[%s0 + $0x8] sm:$0xff]
  %v15 = vld [vmem:[%s0 + $0x10] sm:$0xff]
  %v16 = vld [vmem:[%s0 + $0x18] sm:$0xff]
  %v17 = vpack.c.bf16 %v15, %v13
  %v18 = vpack.c.bf16 %v16, %v14
  %v19 = vld [vmem:[%s1] sm:$0xff]
  %v20 = vld [vmem:[%s1 + $0x8] sm:$0xff]
  %v21 = vld [vmem:[%s1 + $0x10] sm:$0xff]
  %v22 = vld [vmem:[%s1 + $0x18] sm:$0xff]
  %v23 = vld [vmem:[%s1 + $0x20] sm:$0xff]
  %v24 = vld [vmem:[%s1 + $0x28] sm:$0xff]
  %v25 = vld [vmem:[%s1 + $0x30] sm:$0xff]
  %v26 = vld [vmem:[%s1 + $0x38] sm:$0xff]
  %v27 = vld [vmem:[%s1 + $0x40] sm:$0xff]
  %v28 = vld [vmem:[%s1 + $0x48] sm:$0xff]
  %v29 = vld [vmem:[%s1 + $0x50] sm:$0xff]
  %v30 = vld [vmem:[%s1 + $0x58] sm:$0xff]
  %v31 = vld [vmem:[%s1 + $0x60] sm:$0xff]
  %v32 = vld [vmem:[%s1 + $0x68] sm:$0xff]
  %v33 = vld [vmem:[%s1 + $0x70] sm:$0xff]
  %v34 = vld [vmem:[%s1 + $0x78] sm:$0xff]
  %v35 = vld [vmem:[%s1 + $0x80] sm:$0xff]
  %v36 = vld [vmem:[%s1 + $0x88] sm:$0xff]
  %v37 = vld [vmem:[%s1 + $0x90] sm:$0xff]
  %v38 = vld [vmem:[%s1 + $0x98] sm:$0xff]
  %v39 = vld [vmem:[%s1 + $0xa0] sm:$0xff]
  %v40 = vld [vmem:[%s1 + $0xa8] sm:$0xff]
  %v41 = vld [vmem:[%s1 + $0xb0] sm:$0xff]
  %v42 = vld [vmem:[%s1 + $0xb8] sm:$0xff]
  %v43 = vld [vmem:[%s1 + $0xc0] sm:$0xff]
  %v44 = vld [vmem:[%s1 + $0xc8] sm:$0xff]
  %v45 = vld [vmem:[%s1 + $0xd0] sm:$0xff]
  %v46 = vld [vmem:[%s1 + $0xd8] sm:$0xff]
  %v47 = vld [vmem:[%s1 + $0xe0] sm:$0xff]
  %v48 = vld [vmem:[%s1 + $0xe8] sm:$0xff]
  %v49 = vld [vmem:[%s1 + $0xf0] sm:$0xff]
  %v50 = vld [vmem:[%s1 + $0xf8] sm:$0xff]
  %v83 = vunpack.c.l.b16 %v19
  %v84 = vunpack.c.h.b16 %v19
  %v85 = vunpack.c.l.b16 %v20
  %v86 = vunpack.c.h.b16 %v20
  %v87 = vunpack.c.l.b16 %v21
  %v88 = vunpack.c.h.b16 %v21
  %v89 = vunpack.c.l.b16 %v22
  %v90 = vunpack.c.h.b16 %v22
  %v91 = vunpack.c.l.b16 %v23
  %v92 = vunpack.c.h.b16 %v23
  %v93 = vunpack.c.l.b16 %v24
  %v94 = vunpack.c.h.b16 %v24
  %v95 = vunpack.c.l.b16 %v25
  %v96 = vunpack.c.h.b16 %v25
  %v97 = vunpack.c.l.b16 %v26
  %v98 = vunpack.c.h.b16 %v26
  %v99 = vunpack.c.l.b16 %v27
  %v100 = vunpack.c.h.b16 %v27
  %v101 = vunpack.c.l.b16 %v28
  %v102 = vunpack.c.h.b16 %v28
  %v103 = vunpack.c.l.b16 %v29
  %v104 = vunpack.c.h.b16 %v29
  %v105 = vunpack.c.l.b16 %v30
  %v106 = vunpack.c.h.b16 %v30
  %v107 = vunpack.c.l.b16 %v31
  %v108 = vunpack.c.h.b16 %v31
  %v109 = vunpack.c.l.b16 %v32
  %v110 = vunpack.c.h.b16 %v32
  %v111 = vunpack.c.l.b16 %v33
  %v112 = vunpack.c.h.b16 %v33
  %v113 = vunpack.c.l.b16 %v34
  %v114 = vunpack.c.h.b16 %v34
  %v115 = vunpack.c.l.b16 %v35
  %v116 = vunpack.c.h.b16 %v35
  %v117 = vunpack.c.l.b16 %v36
  %v118 = vunpack.c.h.b16 %v36
  %v119 = vunpack.c.l.b16 %v37
  %v120 = vunpack.c.h.b16 %v37
  %v121 = vunpack.c.l.b16 %v38
  %v122 = vunpack.c.h.b16 %v38
  %v123 = vunpack.c.l.b16 %v39
  %v124 = vunpack.c.h.b16 %v39
  %v125 = vunpack.c.l.b16 %v40
  %v126 = vunpack.c.h.b16 %v40
  %v127 = vunpack.c.l.b16 %v41
  %v128 = vunpack.c.h.b16 %v41
  %v129 = vunpack.c.l.b16 %v42
  %v130 = vunpack.c.h.b16 %v42
  %v131 = vunpack.c.l.b16 %v43
  %v132 = vunpack.c.h.b16 %v43
  %v133 = vunpack.c.l.b16 %v44
  %v134 = vunpack.c.h.b16 %v44
  %v135 = vunpack.c.l.b16 %v45
  %v136 = vunpack.c.h.b16 %v45
  %v137 = vunpack.c.l.b16 %v46
  %v138 = vunpack.c.h.b16 %v46
  %v139 = vunpack.c.l.b16 %v47
  %v140 = vunpack.c.h.b16 %v47
  %v141 = vunpack.c.l.b16 %v48
  %v142 = vunpack.c.h.b16 %v48
  %v143 = vunpack.c.l.b16 %v49
  %v144 = vunpack.c.h.b16 %v49
  %v145 = vunpack.c.l.b16 %v50
  %v146 = vunpack.c.h.b16 %v50
  %v147 = vpack.c.b16 %v85, %v83
  %v148 = vpack.c.b16 %v86, %v84
  %v149 = vpack.c.b16 %v89, %v87
  %v150 = vpack.c.b16 %v90, %v88
  %v151 = vpack.c.b16 %v93, %v91
  %v152 = vpack.c.b16 %v94, %v92
  %v153 = vpack.c.b16 %v97, %v95
  %v154 = vpack.c.b16 %v98, %v96
  %v155 = vpack.c.b16 %v101, %v99
  %v156 = vpack.c.b16 %v102, %v100
  %v157 = vpack.c.b16 %v105, %v103
  %v158 = vpack.c.b16 %v106, %v104
  %v159 = vpack.c.b16 %v109, %v107
  %v160 = vpack.c.b16 %v110, %v108
  %v161 = vpack.c.b16 %v113, %v111
  %v162 = vpack.c.b16 %v114, %v112
  %v163 = vpack.c.b16 %v117, %v115
  %v164 = vpack.c.b16 %v118, %v116
  %v165 = vpack.c.b16 %v121, %v119
  %v166 = vpack.c.b16 %v122, %v120
  %v167 = vpack.c.b16 %v125, %v123
  %v168 = vpack.c.b16 %v126, %v124
  %v169 = vpack.c.b16 %v129, %v127
  %v170 = vpack.c.b16 %v130, %v128
  %v171 = vpack.c.b16 %v133, %v131
  %v172 = vpack.c.b16 %v134, %v132
  %v173 = vpack.c.b16 %v137, %v135
  %v174 = vpack.c.b16 %v138, %v136
  %v175 = vpack.c.b16 %v141, %v139
  %v176 = vpack.c.b16 %v142, %v140
  %v177 = vpack.c.b16 %v145, %v143
  %v178 = vpack.c.b16 %v146, %v144
  %211 = vmatprep.subr.bf16.mxu0 %v162
  %212 = vmatpush1.bf16.msra.mxu0 %v161
  %213 = vmatprep.subr.bf16.mxu0 %v160
  %214 = vmatpush1.bf16.msra.mxu0 %v159
  %215 = vmatprep.subr.bf16.mxu0 %v158
  %216 = vmatpush1.bf16.msra.mxu0 %v157
  %217 = vmatprep.subr.bf16.mxu0 %v156
  %218 = vmatpush1.bf16.msra.mxu0 %v155
  %219 = vmatprep.subr.bf16.mxu0 %v154
  %220 = vmatpush1.bf16.msra.mxu0 %v153
  %221 = vmatprep.subr.bf16.mxu0 %v152
  %222 = vmatpush1.bf16.msra.mxu0 %v151
  %223 = vmatprep.subr.bf16.mxu0 %v150
  %224 = vmatpush1.bf16.msra.mxu0 %v149
  %225 = vmatprep.subr.bf16.mxu0 %v148
  %226 = vmatpush1.bf16.msra.mxu0 %v147
  %227 = vmatprep.subr.bf16.mxu0 %v178
  %228 = vmatpush2.bf16.msra.mxu0 %v177
  %229 = vmatprep.subr.bf16.mxu0 %v176
  %230 = vmatpush2.bf16.msra.mxu0 %v175
  %231 = vmatprep.subr.bf16.mxu0 %v174
  %232 = vmatpush2.bf16.msra.mxu0 %v173
  %233 = vmatprep.subr.bf16.mxu0 %v172
  %234 = vmatpush2.bf16.msra.mxu0 %v171
  %235 = vmatprep.subr.bf16.mxu0 %v170
  %236 = vmatpush2.bf16.msra.mxu0 %v169
  %237 = vmatprep.subr.bf16.mxu0 %v168
  %238 = vmatpush2.bf16.msra.mxu0 %v167
  %239 = vmatprep.subr.bf16.mxu0 %v166
  %240 = vmatpush2.bf16.msra.mxu0 %v165
  %241 = vmatprep.subr.bf16.mxu0 %v164
  %242 = vmatpush2.bf16.msra.mxu0 %v163
  %243 = vmatprep.mubr.bf16.mxu0 %v18
  %244 = vmatmul.mubr.bf16.gmra.mxu0 %v17
  %v245 = vpop.f32.mrf.mxu0
  %v246 = vadd.f32 0.0, %v245
  %v247 = vpop.f32.mrf.mxu0
  %v248 = vadd.f32 0.0, %v247
  %v249 = vpop.f32.mrf.mxu0
  %v250 = vadd.f32 0.0, %v249
  %v251 = vpop.f32.mrf.mxu0
  %v252 = vadd.f32 0.0, %v251
  %253 = vdwg.mxu0
  %v254 = vadd.f32 %v246, %v250
  %v255 = vrot.slane %v254, 4
  %v256 = vadd.f32 %v254, %v255
  %v257 = vrot.slane %v256, 2
  %v258 = vadd.f32 %v256, %v257
  %v259 = vrot.slane %v258, 1
  %v260 = vadd.f32 %v258, %v259
  %v261 = vadd.f32 %v248, %v252
  %v262 = vrot.slane %v261, 4
  %v263 = vadd.f32 %v261, %v262
  %v264 = vrot.slane %v263, 2
  %v265 = vadd.f32 %v263, %v264
  %v266 = vrot.slane %v265, 1
  %v267 = vadd.f32 %v265, %v266
  %v270 = vcombine.low %v260, %v267
  %v272 = vunpack.c.l.s4 1966171168
  %v273 = vunpack.c.0.s8 %v272
  %v274 = vlaneseq
  %v275 = vshrl.u32 %v274, 7
  %v276 = vsub.s32 %v273, %v275
  %v277 = vrot.slane %v270, %v276
  %v279 = vunpack.c.l.s4 1966171168
  %v280 = vunpack.c.0.s8 %v279
  %v281 = vlaneseq
  %v282 = vshrl.u32 %v281, 7
  %v283 = vsub.s32 %v280, %v282
  %v284 = vrot.slane %v277, %v283
  %v286 = vlaneseq
  %vm287 = vcmp.ge.s32.totalorder %v286, 0
  %vm288 = vcmp.lt.s32.totalorder %v286, 256
  %vm289 = vmand %vm287, %vm288
  %290 = vst.msk [vmem:[%s3] ss:$2 sm:$0x3] %vm289, %v284
  %v291 = vmul.f32 %v246, %v246
  %v292 = vmul.f32 %v248, %v248
  %v293 = vmul.f32 %v250, %v250
  %v294 = vmul.f32 %v252, %v252
  %v295 = vadd.f32 %v291, %v293
  %v296 = vrot.slane %v295, 4
  %v297 = vadd.f32 %v295, %v296
  %v298 = vrot.slane %v297, 2
  %v299 = vadd.f32 %v297, %v298
  %v300 = vrot.slane %v299, 1
  %v301 = vadd.f32 %v299, %v300
  %v302 = vadd.f32 %v292, %v294
  %v303 = vrot.slane %v302, 4
  %v304 = vadd.f32 %v302, %v303
  %v305 = vrot.slane %v304, 2
  %v306 = vadd.f32 %v304, %v305
  %v307 = vrot.slane %v306, 1
  %v308 = vadd.f32 %v306, %v307
  %v311 = vcombine.low %v301, %v308
  %v313 = vunpack.c.l.s4 1966171168
  %v314 = vunpack.c.0.s8 %v313
  %v315 = vlaneseq
  %v316 = vshrl.u32 %v315, 7
  %v317 = vsub.s32 %v314, %v316
  %v318 = vrot.slane %v311, %v317
  %v320 = vunpack.c.l.s4 1966171168
  %v321 = vunpack.c.0.s8 %v320
  %v322 = vlaneseq
  %v323 = vshrl.u32 %v322, 7
  %v324 = vsub.s32 %v321, %v323
  %v325 = vrot.slane %v318, %v324
  %s327 = scalar_lea.vmem %s3, 1
  %328 = vst.msk [vmem:[%s327] ss:$2 sm:$0x3] %vm289, %v325
  %v329 = vpack.c.bf16 %v250, %v246
  %v330 = vpack.c.bf16 %v252, %v248
  %v333 = vunpack.c.l.b16 %v329
  %v334 = vunpack.c.l.b16 %v330
  %v335 = vunpack.c.h.b16 %v329
  %v336 = vunpack.c.h.b16 %v330
  %v337 = vpack.c.b16 %v334, %v333
  %v338 = vpack.c.b16 %v336, %v335
  %341 = vst [vmem:[%s2] sm:$0xff] %v337
  %342 = vst [vmem:[%s2 + $0x8] sm:$0xff] %v338
  // Predicated region
  $region10: #{discriminator_forward.3} parent=0 // pred_check
    _
  $region11: #{discriminator_forward.3} parent=0 // pred_check_branch
    %344 = sbr.rel (0) target = $region13
  $region12: #{discriminator_forward.3} parent=0 // pred_region
    _
  $region13: #{discriminator_forward.3} parent=0 // pred_fallthru
    _
  // Predicated region
  $region14: #{discriminator_forward.3} parent=0 // pred_check
    _
  $region15: #{discriminator_forward.3} parent=0 // pred_check_branch
    %346 = sbr.rel (0) target = $region17
  $region16: #{discriminator_forward.3} parent=0 // pred_region
    _
  $region17: #{discriminator_forward.3} parent=0 // pred_fallthru
    _
  // Predicated region
  $region18: #{discriminator_forward.3} parent=0 // pred_check
    _
  $region19: #{discriminator_forward.3} parent=0 // pred_check_branch
    %348 = sbr.rel (0) target = $region21
  $region20: #{discriminator_forward.3} parent=0 // pred_region
    _
  $region21: #{discriminator_forward.3} parent=0 // pred_fallthru
    _
  // Predicated region
  $region22: #{discriminator_forward.3} parent=0 // pred_check
    _
  $region23: #{discriminator_forward.3} parent=0 // pred_check_branch
    %350 = sbr.rel (0) target = $region25
  $region24: #{discriminator_forward.3} parent=0 // pred_region
    _
  $region25: #{discriminator_forward.3} parent=0 // pred_fallthru
    _

</llo_original>
